<compile_context>
chip_gen: v5e
topology: v5e:2x2
jax: 0.10.0
libtpu: 0.0.40
codegen_flags: <defaults>
</compile_context>

<pallas_src>
import jax
import jax.numpy as jnp
from jax.experimental import pallas as pl
from jax.experimental.pallas import tpu as pltpu

B, S, H, V = 2, 8, 32, 128   # small synthetic shapes (vocab = 128)


def _round_up(x, m):
    return (x + m - 1) // m * m


def _make_kernel(v_real, v_pad):
    mask_vocab_pad = v_pad > v_real

    def kernel(h_ref, w_ref, lbl_ref, scl_ref, out_ref, m_acc, l_acc, s_acc):
        # h_ref:   (tm, H)  bf16   flattened hidden rows for this row block
        # w_ref:   (H, tv)  bf16   lm_head weight, one vocab tile
        # lbl_ref: (tm, 1)  i32    next-token label per row
        # scl_ref: (tm, 1)  f32    per-row scale = valid / (tsum - 1 + 1e-9)
        # out_ref: (tm, 128) f32   per-row contribution, lane-broadcast slab
        # m/l/s_acc: (tm, 1) f32   online-LSE carry + gathered label logit
        vt = pl.program_id(1)

        @pl.when(vt == 0)
        def _init():
            m_acc[...] = jnp.full_like(m_acc, -jnp.inf)
            l_acc[...] = jnp.zeros_like(l_acc)
            s_acc[...] = jnp.zeros_like(s_acc)

        # (tm, H) @ (H, tv) -> (tm, tv) f32 on the MXU.
        logits = jnp.dot(h_ref[...], w_ref[...],
                         preferred_element_type=jnp.float32)
        tv = logits.shape[1]
        gid = jax.lax.broadcasted_iota(jnp.int32, logits.shape, 1) + vt * tv
        if mask_vocab_pad:
            logits = jnp.where(gid < v_real, logits, -jnp.inf)

        # Online log-sum-exp update (streaming over vocab tiles).
        m_prev = m_acc[...]
        m_new = jnp.maximum(m_prev, jnp.max(logits, axis=-1, keepdims=True))
        alpha = jnp.exp(m_prev - m_new)
        l_new = l_acc[...] * alpha + jnp.sum(jnp.exp(logits - m_new),
                                             axis=-1, keepdims=True)
        # Fused label gather: the label lane lives in exactly one vocab tile.
        sel = jnp.sum(jnp.where(gid == lbl_ref[...], logits, 0.0),
                      axis=-1, keepdims=True)

        m_acc[...] = m_new
        l_acc[...] = l_new
        s_acc[...] = s_acc[...] + sel

        @pl.when(vt == pl.num_programs(1) - 1)
        def _finalize():
            lse = m_acc[...] + jnp.log(l_acc[...])
            contrib = scl_ref[...] * (s_acc[...] - lse)          # (tm, 1)
            out_ref[...] = jnp.broadcast_to(contrib, out_ref.shape)

    return kernel


def lm_scores(hidden, w, input_ids, attention_mask, *,
              row_tile=None, vocab_tile=512):
    """Pallas equivalent of LMScorer.compute_lm_scores given hidden states.

    hidden: (B, S, H) bf16, w: (H, V) bf16, input_ids/attention_mask: (B, S).
    Returns (B,) f32 scores.
    """
    b, s, h_dim = hidden.shape
    v = w.shape[1]
    m = b * s

    # Row tiling: keep all rows resident in one block when small (W streamed
    # from HBM exactly once); otherwise use 256-row blocks (128-multiple,
    # MXU-friendly on v5e/v6e/v7x).
    if row_tile is None:
        row_tile = _round_up(m, 128) if m <= 1024 else 256
    tm = row_tile
    m_pad = _round_up(m, tm)

    # Vocab tiling: lane-multiple tiles, sized so 2x double-buffered W tiles
    # fit comfortably in VMEM even on v7x (64 MiB).
    tv = _round_up(min(vocab_tile, _round_up(v, 128)), 128)
    v_pad = _round_up(v, tv)

    # ---- host-side (cheap) prep: flatten, shift labels, per-row scale ----
    h_flat = jnp.pad(hidden.reshape(m, h_dim), ((0, m_pad - m), (0, 0)))
    w_pad = jnp.pad(w, ((0, 0), (0, v_pad - v))) if v_pad > v else w

    shifted = jnp.concatenate(
        [input_ids[:, 1:], jnp.zeros((b, 1), input_ids.dtype)], axis=1)
    labels = jnp.pad(shifted.reshape(m).astype(jnp.int32),
                     (0, m_pad - m)).reshape(m_pad, 1)

    amask = attention_mask.astype(jnp.float32)
    tsum = amask.sum(axis=1)                                  # (B,)
    denom = tsum - 1.0 + 1e-9
    pos = jnp.arange(s, dtype=jnp.float32)[None, :]
    valid = (pos < (tsum[:, None] - 1.0)).astype(jnp.float32)  # right-padded mask
    row_scale = (valid / denom[:, None]).reshape(m)
    scale = jnp.pad(row_scale, (0, m_pad - m)).reshape(m_pad, 1)

    n_rb = m_pad // tm
    n_vt = v_pad // tv
    kernel = _make_kernel(v_real=v, v_pad=v_pad)

    out = pl.pallas_call(
        kernel,
        out_shape=jax.ShapeDtypeStruct((m_pad, 128), jnp.float32),
        grid_spec=pltpu.PrefetchScalarGridSpec(
            num_scalar_prefetch=0,
            grid=(n_rb, n_vt),
            in_specs=[
                pl.BlockSpec((tm, h_dim), lambda rb, vt: (rb, 0)),   # hidden rows
                pl.BlockSpec((h_dim, tv), lambda rb, vt: (0, vt)),   # lm_head W tile
                pl.BlockSpec((tm, 1), lambda rb, vt: (rb, 0)),       # labels
                pl.BlockSpec((tm, 1), lambda rb, vt: (rb, 0)),       # per-row scale
            ],
            out_specs=pl.BlockSpec((tm, 128), lambda rb, vt: (rb, 0)),
            scratch_shapes=[pltpu.VMEM((tm, 1), jnp.float32)] * 3,
        ),
        compiler_params=pltpu.CompilerParams(
            dimension_semantics=("parallel", "arbitrary"),
            vmem_limit_bytes=48 * 1024 * 1024,
        ),
    )(h_flat, w_pad, labels, scale)

    per_row = out[:m, 0]                       # scaled log-prob contribution per row
    return per_row.reshape(b, s).sum(axis=1)   # (B,)


def ref_lm_scores(hidden, w, input_ids, attention_mask):
    """Pure-JAX reference mirroring the PyTorch loop semantics."""
    logits = jnp.einsum("bsh,hv->bsv", hidden, w,
                        preferred_element_type=jnp.float32)
    logp = jax.nn.log_softmax(logits, axis=-1)
    scores = []
    for i in range(hidden.shape[0]):
        tsum = int(attention_mask[i].sum())
        lp = 0.0
        for t in range(tsum - 1):
            lp = lp + logp[i, t, int(input_ids[i, t + 1])]
        scores.append(lp / (tsum - 1 + 1e-9))
    return jnp.array(scores, dtype=jnp.float32)


if __name__ == "__main__":
    # TODO(synk): tokenizer + pretrained causal-LM backbone (self.lm.model) have
    # no Pallas equivalent; hidden states / ids / mask are synthesized instead.
    key = jax.random.PRNGKey(0)
    k1, k2, k3 = jax.random.split(key, 3)

    hidden = jax.random.normal(k1, (B, S, H), jnp.float32).astype(jnp.bfloat16)
    w = (0.05 * jax.random.normal(k2, (H, V), jnp.float32)).astype(jnp.bfloat16)
    input_ids = jax.random.randint(k3, (B, S), 0, V, dtype=jnp.int32)
    # sequence 0 uses all 8 tokens, sequence 1 is right-padded to 5 tokens
    attention_mask = jnp.array(
        [[1, 1, 1, 1, 1, 1, 1, 1],
         [1, 1, 1, 1, 1, 0, 0, 0]], dtype=jnp.int32)

    scores = jax.block_until_ready(
        lm_scores(hidden, w, input_ids, attention_mask))
    ref = ref_lm_scores(hidden, w, input_ids, attention_mask)

    assert scores.shape == (B,)
    assert jnp.allclose(scores, ref, atol=1e-3, rtol=1e-3), (scores, ref)
    print("KERNEL_OK")
</pallas_src>

<mosaic_0001>
module attributes {stable_mosaic.version = 11 : i64} {
  func.func @kernel(%arg0: i32, %arg1: i32, %arg2: memref<128x32xbf16, #tpu.memory_space<vmem>>, %arg3: memref<32x128xbf16, #tpu.memory_space<vmem>>, %arg4: memref<128x1xi32, #tpu.memory_space<vmem>>, %arg5: memref<128x1xf32, #tpu.memory_space<vmem>>, %arg6: memref<128x128xf32, #tpu.memory_space<vmem>>, %arg7: memref<128x1xf32, #tpu.memory_space<vmem>>, %arg8: memref<128x1xf32, #tpu.memory_space<vmem>>, %arg9: memref<128x1xf32, #tpu.memory_space<vmem>>) attributes {dimension_semantics = [#tpu.dimension_semantics<parallel>, #tpu.dimension_semantics<arbitrary>], iteration_bounds = array<i64: 1, 1>, scalar_prefetch = 0 : i64, scratch_operands = 3 : i64, tpu.core_type = #tpu.core_type<tc>, window_params = [{transform_indices = @transform_0, window_bounds = array<i64: 128, 32>}, {transform_indices = @transform_1, window_bounds = array<i64: 32, 128>}, {transform_indices = @transform_2, window_bounds = array<i64: 128, 1>}, {transform_indices = @transform_3, window_bounds = array<i64: 128, 1>}, {transform_indices = @transform_4, window_bounds = array<i64: 128, 128>}]} {
    %c0_i32 = arith.constant 0 : i32
    %0 = arith.cmpi eq, %arg1, %c0_i32 : i32
    %1 = arith.extui %0 : i1 to i32
    %c0_i32_0 = arith.constant 0 : i32
    %2 = arith.cmpi ne, %1, %c0_i32_0 : i32
    scf.if %2 {
      %cst_24 = arith.constant 0xFF800000 : f32
      %39 = vector.broadcast %cst_24 : f32 to vector<128x1xf32>
      %c0_25 = arith.constant 0 : index
      %c0_26 = arith.constant 0 : index
      %40 = vector.load %arg7[%c0_25, %c0_26] : memref<128x1xf32, #tpu.memory_space<vmem>>, vector<128x1xf32>
      tpu.vector_store %arg7[%c0_25, %c0_26], %39 {strides = array<i32>} : memref<128x1xf32, #tpu.memory_space<vmem>>, vector<128x1xf32>,
      %cst_27 = arith.constant 0.000000e+00 : f32
      %41 = vector.broadcast %cst_27 : f32 to vector<128x1xf32>
      %c0_28 = arith.constant 0 : index
      %c0_29 = arith.constant 0 : index
      %42 = vector.load %arg8[%c0_28, %c0_29] : memref<128x1xf32, #tpu.memory_space<vmem>>, vector<128x1xf32>
      tpu.vector_store %arg8[%c0_28, %c0_29], %41 {strides = array<i32>} : memref<128x1xf32, #tpu.memory_space<vmem>>, vector<128x1xf32>,
      %cst_30 = arith.constant 0.000000e+00 : f32
      %43 = vector.broadcast %cst_30 : f32 to vector<128x1xf32>
      %c0_31 = arith.constant 0 : index
      %c0_32 = arith.constant 0 : index
      %44 = vector.load %arg9[%c0_31, %c0_32] : memref<128x1xf32, #tpu.memory_space<vmem>>, vector<128x1xf32>
      tpu.vector_store %arg9[%c0_31, %c0_32], %43 {strides = array<i32>} : memref<128x1xf32, #tpu.memory_space<vmem>>, vector<128x1xf32>,
    } else {
    }
    %c0 = arith.constant 0 : index
    %c0_1 = arith.constant 0 : index
    %3 = vector.load %arg2[%c0, %c0_1] : memref<128x32xbf16, #tpu.memory_space<vmem>>, vector<128x32xbf16>
    %c0_2 = arith.constant 0 : index
    %c0_3 = arith.constant 0 : index
    %4 = vector.load %arg3[%c0_2, %c0_3] : memref<32x128xbf16, #tpu.memory_space<vmem>>, vector<32x128xbf16>
    %cst = arith.constant dense<0.000000e+00> : vector<128x128xf32>
    %5 = tpu.matmul %3, %4, %cst {dimension_numbers = #tpu.dot_dimension_numbers<[1], [0], [0], [1], [0, 0, 1, 1], [], []>} : vector<128x32xbf16>, vector<32x128xbf16>, vector<128x128xf32> -> vector<128x128xf32>
    %6 = tpu.iota {dimensions = array<i32: 1>} : vector<128x128xi32>
    %c128_i32 = arith.constant 128 : i32
    %7 = arith.muli %arg1, %c128_i32 : i32
    %8 = vector.broadcast %7 : i32 to vector<128x128xi32>
    %9 = arith.addi %6, %8 : vector<128x128xi32>
    %c0_4 = arith.constant 0 : index
    %c0_5 = arith.constant 0 : index
    %10 = vector.load %arg7[%c0_4, %c0_5] : memref<128x1xf32, #tpu.memory_space<vmem>>, vector<128x1xf32>
    %cst_6 = arith.constant dense<0xFF800000> : vector<128xf32>
    %11 = vector.multi_reduction <maximumf>, %5, %cst_6 [1] : vector<128x128xf32> to vector<128xf32>
    %12 = vector.shape_cast %11 : vector<128xf32> to vector<128x1xf32>
    %13 = arith.maximumf %10, %12 : vector<128x1xf32>
    %14 = arith.subf %10, %13 : vector<128x1xf32>
    %15 = math.exp %14 : vector<128x1xf32>
    %c0_7 = arith.constant 0 : index
    %c0_8 = arith.constant 0 : index
    %16 = vector.load %arg8[%c0_7, %c0_8] : memref<128x1xf32, #tpu.memory_space<vmem>>, vector<128x1xf32>
    %17 = arith.mulf %16, %15 : vector<128x1xf32>
    %18 = vector.broadcast %13 : vector<128x1xf32> to vector<128x128xf32>
    %19 = arith.subf %5, %18 : vector<128x128xf32>
    %20 = math.exp %19 : vector<128x128xf32>
    %cst_9 = arith.constant dense<0.000000e+00> : vector<128xf32>
    %21 = vector.multi_reduction <add>, %20, %cst_9 [1] : vector<128x128xf32> to vector<128xf32>
    %22 = vector.shape_cast %21 : vector<128xf32> to vector<128x1xf32>
    %23 = arith.addf %17, %22 : vector<128x1xf32>
    %c0_10 = arith.constant 0 : index
    %c0_11 = arith.constant 0 : index
    %24 = vector.load %arg4[%c0_10, %c0_11] : memref<128x1xi32, #tpu.memory_space<vmem>>, vector<128x1xi32>
    %25 = vector.broadcast %24 : vector<128x1xi32> to vector<128x128xi32>
    %26 = arith.cmpi eq, %9, %25 : vector<128x128xi32>
    %cst_12 = arith.constant 0.000000e+00 : f32
    %27 = vector.broadcast %cst_12 : f32 to vector<128x128xf32>
    %28 = arith.select %26, %5, %27 : vector<128x128xi1>, vector<128x128xf32>
    %cst_13 = arith.constant dense<0.000000e+00> : vector<128xf32>
    %29 = vector.multi_reduction <add>, %28, %cst_13 [1] : vector<128x128xf32> to vector<128xf32>
    %30 = vector.shape_cast %29 : vector<128xf32> to vector<128x1xf32>
    %c0_14 = arith.constant 0 : index
    %c0_15 = arith.constant 0 : index
    %31 = vector.load %arg7[%c0_14, %c0_15] : memref<128x1xf32, #tpu.memory_space<vmem>>, vector<128x1xf32>
    tpu.vector_store %arg7[%c0_14, %c0_15], %13 {strides = array<i32>} : memref<128x1xf32, #tpu.memory_space<vmem>>, vector<128x1xf32>,
    %c0_16 = arith.constant 0 : index
    %c0_17 = arith.constant 0 : index
    %32 = vector.load %arg8[%c0_16, %c0_17] : memref<128x1xf32, #tpu.memory_space<vmem>>, vector<128x1xf32>
    tpu.vector_store %arg8[%c0_16, %c0_17], %23 {strides = array<i32>} : memref<128x1xf32, #tpu.memory_space<vmem>>, vector<128x1xf32>,
    %c0_18 = arith.constant 0 : index
    %c0_19 = arith.constant 0 : index
    %33 = vector.load %arg9[%c0_18, %c0_19] : memref<128x1xf32, #tpu.memory_space<vmem>>, vector<128x1xf32>
    %34 = arith.addf %33, %30 : vector<128x1xf32>
    %c0_20 = arith.constant 0 : index
    %c0_21 = arith.constant 0 : index
    %35 = vector.load %arg9[%c0_20, %c0_21] : memref<128x1xf32, #tpu.memory_space<vmem>>, vector<128x1xf32>
    tpu.vector_store %arg9[%c0_20, %c0_21], %34 {strides = array<i32>} : memref<128x1xf32, #tpu.memory_space<vmem>>, vector<128x1xf32>,
    %c0_i32_22 = arith.constant 0 : i32
    %36 = arith.cmpi eq, %arg1, %c0_i32_22 : i32
    %37 = arith.extui %36 : i1 to i32
    %c0_i32_23 = arith.constant 0 : i32
    %38 = arith.cmpi ne, %37, %c0_i32_23 : i32
    scf.if %38 {
      %c0_24 = arith.constant 0 : index
      %c0_25 = arith.constant 0 : index
      %39 = vector.load %arg7[%c0_24, %c0_25] : memref<128x1xf32, #tpu.memory_space<vmem>>, vector<128x1xf32>
      %c0_26 = arith.constant 0 : index
      %c0_27 = arith.constant 0 : index
      %40 = vector.load %arg8[%c0_26, %c0_27] : memref<128x1xf32, #tpu.memory_space<vmem>>, vector<128x1xf32>
      %41 = math.log %40 : vector<128x1xf32>
      %42 = arith.addf %39, %41 : vector<128x1xf32>
      %c0_28 = arith.constant 0 : index
      %c0_29 = arith.constant 0 : index
      %43 = vector.load %arg5[%c0_28, %c0_29] : memref<128x1xf32, #tpu.memory_space<vmem>>, vector<128x1xf32>
      %c0_30 = arith.constant 0 : index
      %c0_31 = arith.constant 0 : index
      %44 = vector.load %arg9[%c0_30, %c0_31] : memref<128x1xf32, #tpu.memory_space<vmem>>, vector<128x1xf32>
      %45 = arith.subf %44, %42 : vector<128x1xf32>
      %46 = arith.mulf %43, %45 : vector<128x1xf32>
      %47 = vector.shape_cast %46 : vector<128x1xf32> to vector<128x1xf32>
      %48 = vector.broadcast %47 : vector<128x1xf32> to vector<128x128xf32>
      %c0_32 = arith.constant 0 : index
      %c0_33 = arith.constant 0 : index
      %49 = vector.load %arg6[%c0_32, %c0_33] : memref<128x128xf32, #tpu.memory_space<vmem>>, vector<128x128xf32>
      tpu.vector_store %arg6[%c0_32, %c0_33], %48 {strides = array<i32>} : memref<128x128xf32, #tpu.memory_space<vmem>>, vector<128x128xf32>,
    } else {
    }
    return
  }
  func.func @transform_0(%arg0: i32, %arg1: i32) -> (i32, i32) {
    %c0_i32 = arith.constant 0 : i32
    %c0_i32_0 = arith.constant 0 : i32
    return %arg0, %c0_i32 : i32, i32
  }
  func.func @transform_1(%arg0: i32, %arg1: i32) -> (i32, i32) {
    %c0_i32 = arith.constant 0 : i32
    %c0_i32_0 = arith.constant 0 : i32
    return %c0_i32, %arg1 : i32, i32
  }
  func.func @transform_2(%arg0: i32, %arg1: i32) -> (i32, i32) {
    %c0_i32 = arith.constant 0 : i32
    %c0_i32_0 = arith.constant 0 : i32
    return %arg0, %c0_i32 : i32, i32
  }
  func.func @transform_3(%arg0: i32, %arg1: i32) -> (i32, i32) {
    %c0_i32 = arith.constant 0 : i32
    %c0_i32_0 = arith.constant 0 : i32
    return %arg0, %c0_i32 : i32, i32
  }
  func.func @transform_4(%arg0: i32, %arg1: i32) -> (i32, i32) {
    %c0_i32 = arith.constant 0 : i32
    %c0_i32_0 = arith.constant 0 : i32
    return %arg0, %c0_i32 : i32, i32
  }
}

</mosaic_0001>

<llo_original>
// kernel: tpu_custom_call.1
$region0: #{tpu_custom_call.1}
  #allocation0 [shape = 'u32[]', space=smem, size = 0x4, offset = 0x4, fixed_abs, tag = 'smem constant byte address 0x4 - core index']
  #allocation1 [shape = 'u32[72,128]{1,0:T(1,128)}', space=vmem, size = 0x9000, scoped, tag = 'internal scratch']
  #allocation2 [shape = 'f32[128,1]{1,0:T(8,128)}', space=vmem, size = 0x10000, scoped, tag = 'scratch operand']
  #allocation3 [shape = 'f32[128,1]{1,0:T(8,128)}', space=vmem, size = 0x10000, scoped, tag = 'scratch operand']
  #allocation4 [shape = 'f32[128,1]{1,0:T(8,128)}', space=vmem, size = 0x10000, scoped, tag = 'scratch operand']
  %s0 = inlined_call_operand.vmem [shape: bf16[128,32], index: 0, kind: input, shape index: {}]
  %s1 = inlined_call_operand.vmem [shape: bf16[32,128], index: 1, kind: input, shape index: {}]
  %s2 = inlined_call_operand.vmem [shape: s32[128,1], index: 2, kind: input, shape index: {}]
  %s3 = inlined_call_operand.vmem [shape: f32[128,1], index: 3, kind: input, shape index: {}]
  %s4 = inlined_call_operand.hbm [shape: f32[128,128], index: 4, kind: output, shape index: {}]
  %s5 = sld [smem:[#allocation0]]
  $region34: #{tpu_custom_call.1} parent=0
    _
  %s7 = ssub.s32 1, %s5
  %s8 = scalar_select 0, %s7, %s5
  $region1: #{tpu_custom_call.1} parent=0
    #allocation5 [shape = 'u8[65536]{0}', space=vmem, size = 0x10000, scoped, tag = 'output window, operand 0, single buffered']
    #allocation6 [shape = 's32[1]{0}', space=sflag, size = 0x4, scoped, tag = 'scoped memory for tpu_custom_call.1']
    %9 = vsyncpa [#allocation6], 0
    // Predicated region
    $region2: #{tpu_custom_call.1} parent=1 // pred_check
      _
    $region3: #{tpu_custom_call.1} parent=1 // pred_check_branch
      %11 = sbr.rel (0) target = $region5
    $region4: #{tpu_custom_call.1} parent=1 // pred_region
      _
    $region5: #{tpu_custom_call.1} parent=1 // pred_fallthru
      _
    // Predicated region
    $region6: #{tpu_custom_call.1} parent=1 // pred_check
      _
    $region7: #{tpu_custom_call.1} parent=1 // pred_check_branch
      %13 = sbr.rel (0) target = $region9
    $region8: #{tpu_custom_call.1} parent=1 // pred_region
      _
    $region9: #{tpu_custom_call.1} parent=1 // pred_fallthru
      _
    // Predicated region
    $region10: #{tpu_custom_call.1} parent=1 // pred_check
      _
    $region11: #{tpu_custom_call.1} parent=1 // pred_check_branch
      %15 = sbr.rel (0) target = $region13
    $region12: #{tpu_custom_call.1} parent=1 // pred_region
      _
    $region13: #{tpu_custom_call.1} parent=1 // pred_fallthru
      _
    // Predicated region
    $region14: #{tpu_custom_call.1} parent=1 // pred_check
      _
    $region15: #{tpu_custom_call.1} parent=1 // pred_check_branch
      %17 = sbr.rel (0) target = $region17
    $region16: #{tpu_custom_call.1} parent=1 // pred_region
      _
    $region17: #{tpu_custom_call.1} parent=1 // pred_fallthru
      _
    %p19 = scmp.eq.s32.totalorder 0, 0
    // Predicated region
    $region18: #{tpu_custom_call.1} parent=1 // pred_check
      %p20 = pneg %p19
    $region19: #{tpu_custom_call.1} parent=1 // pred_check_branch
      %22 = sbr.rel (%p20) target = $region21
    $region20: #{tpu_custom_call.1} parent=1 // pred_region
      %vm23 = vcmask 7168
      %24 = vst.msk [vmem:[#allocation2] sm:$0xff] %vm23, -inf
      %25 = vst.msk [vmem:[#allocation2 + $0x8] sm:$0xff] %vm23, -inf
      %26 = vst.msk [vmem:[#allocation2 + $0x10] sm:$0xff] %vm23, -inf
      %27 = vst.msk [vmem:[#allocation2 + $0x18] sm:$0xff] %vm23, -inf
      %28 = vst.msk [vmem:[#allocation2 + $0x20] sm:$0xff] %vm23, -inf
      %29 = vst.msk [vmem:[#allocation2 + $0x28] sm:$0xff] %vm23, -inf
      %30 = vst.msk [vmem:[#allocation2 + $0x30] sm:$0xff] %vm23, -inf
      %31 = vst.msk [vmem:[#allocation2 + $0x38] sm:$0xff] %vm23, -inf
      %32 = vst.msk [vmem:[#allocation2 + $0x40] sm:$0xff] %vm23, -inf
      %33 = vst.msk [vmem:[#allocation2 + $0x48] sm:$0xff] %vm23, -inf
      %34 = vst.msk [vmem:[#allocation2 + $0x50] sm:$0xff] %vm23, -inf
      %35 = vst.msk [vmem:[#allocation2 + $0x58] sm:$0xff] %vm23, -inf
      %36 = vst.msk [vmem:[#allocation2 + $0x60] sm:$0xff] %vm23, -inf
      %37 = vst.msk [vmem:[#allocation2 + $0x68] sm:$0xff] %vm23, -inf
      %38 = vst.msk [vmem:[#allocation2 + $0x70] sm:$0xff] %vm23, -inf
      %39 = vst.msk [vmem:[#allocation2 + $0x78] sm:$0xff] %vm23, -inf
      %40 = vst.msk [vmem:[#allocation3] sm:$0xff] %vm23, 0.0
      %41 = vst.msk [vmem:[#allocation3 + $0x8] sm:$0xff] %vm23, 0.0
      %42 = vst.msk [vmem:[#allocation3 + $0x10] sm:$0xff] %vm23, 0.0
      %43 = vst.msk [vmem:[#allocation3 + $0x18] sm:$0xff] %vm23, 0.0
      %44 = vst.msk [vmem:[#allocation3 + $0x20] sm:$0xff] %vm23, 0.0
      %45 = vst.msk [vmem:[#allocation3 + $0x28] sm:$0xff] %vm23, 0.0
      %46 = vst.msk [vmem:[#allocation3 + $0x30] sm:$0xff] %vm23, 0.0
      %47 = vst.msk [vmem:[#allocation3 + $0x38] sm:$0xff] %vm23, 0.0
      %48 = vst.msk [vmem:[#allocation3 + $0x40] sm:$0xff] %vm23, 0.0
      %49 = vst.msk [vmem:[#allocation3 + $0x48] sm:$0xff] %vm23, 0.0
      %50 = vst.msk [vmem:[#allocation3 + $0x50] sm:$0xff] %vm23, 0.0
      %51 = vst.msk [vmem:[#allocation3 + $0x58] sm:$0xff] %vm23, 0.0
      %52 = vst.msk [vmem:[#allocation3 + $0x60] sm:$0xff] %vm23, 0.0
      %53 = vst.msk [vmem:[#allocation3 + $0x68] sm:$0xff] %vm23, 0.0
      %54 = vst.msk [vmem:[#allocation3 + $0x70] sm:$0xff] %vm23, 0.0
      %55 = vst.msk [vmem:[#allocation3 + $0x78] sm:$0xff] %vm23, 0.0
      %56 = vst.msk [vmem:[#allocation4] sm:$0xff] %vm23, 0.0
      %57 = vst.msk [vmem:[#allocation4 + $0x8] sm:$0xff] %vm23, 0.0
      %58 = vst.msk [vmem:[#allocation4 + $0x10] sm:$0xff] %vm23, 0.0
      %59 = vst.msk [vmem:[#allocation4 + $0x18] sm:$0xff] %vm23, 0.0
      %60 = vst.msk [vmem:[#allocation4 + $0x20] sm:$0xff] %vm23, 0.0
      %61 = vst.msk [vmem:[#allocation4 + $0x28] sm:$0xff] %vm23, 0.0
      %62 = vst.msk [vmem:[#allocation4 + $0x30] sm:$0xff] %vm23, 0.0
      %63 = vst.msk [vmem:[#allocation4 + $0x38] sm:$0xff] %vm23, 0.0
      %64 = vst.msk [vmem:[#allocation4 + $0x40] sm:$0xff] %vm23, 0.0
      %65 = vst.msk [vmem:[#allocation4 + $0x48] sm:$0xff] %vm23, 0.0
      %66 = vst.msk [vmem:[#allocation4 + $0x50] sm:$0xff] %vm23, 0.0
      %67 = vst.msk [vmem:[#allocation4 + $0x58] sm:$0xff] %vm23, 0.0
      %68 = vst.msk [vmem:[#allocation4 + $0x60] sm:$0xff] %vm23, 0.0
      %69 = vst.msk [vmem:[#allocation4 + $0x68] sm:$0xff] %vm23, 0.0
      %70 = vst.msk [vmem:[#allocation4 + $0x70] sm:$0xff] %vm23, 0.0
      %71 = vst.msk [vmem:[#allocation4 + $0x78] sm:$0xff] %vm23, 0.0
    $region21: #{tpu_custom_call.1} parent=1 // pred_fallthru
      _
    %v72 = vld [vmem:[%s0] sm:$0xf]
    %v73 = vld [vmem:[%s0 + $0x4] sm:$0xf]
    %v74 = vld [vmem:[%s0 + $0x8] sm:$0xf]
    %v75 = vld [vmem:[%s0 + $0xc] sm:$0xf]
    %v76 = vld [vmem:[%s0 + $0x10] sm:$0xf]
    %v77 = vld [vmem:[%s0 + $0x14] sm:$0xf]
    %v78 = vld [vmem:[%s0 + $0x18] sm:$0xf]
    %v79 = vld [vmem:[%s0 + $0x1c] sm:$0xf]
    %v80 = vld [vmem:[%s0 + $0x20] sm:$0xf]
    %v81 = vld [vmem:[%s0 + $0x24] sm:$0xf]
    %v82 = vld [vmem:[%s0 + $0x28] sm:$0xf]
    %v83 = vld [vmem:[%s0 + $0x2c] sm:$0xf]
    %v84 = vld [vmem:[%s0 + $0x30] sm:$0xf]
    %v85 = vld [vmem:[%s0 + $0x34] sm:$0xf]
    %v86 = vld [vmem:[%s0 + $0x38] sm:$0xf]
    %v87 = vld [vmem:[%s0 + $0x3c] sm:$0xf]
    %v88 = vld [vmem:[%s1] sm:$0xf]
    %v89 = vld [vmem:[%s1 + $0x4] sm:$0xf]
    %v90 = vld [vmem:[%s1 + $0x8] sm:$0xf]
    %v91 = vld [vmem:[%s1 + $0xc] sm:$0xf]
    %v108 = vunpack.c.l.b16 %v72
    %v109 = vunpack.c.l.b16 %v73
    %v110 = vunpack.c.l.b16 %v74
    %v111 = vunpack.c.l.b16 %v75
    %v112 = vunpack.c.l.b16 %v76
    %v113 = vunpack.c.l.b16 %v77
    %v114 = vunpack.c.l.b16 %v78
    %v115 = vunpack.c.l.b16 %v79
    %v116 = vunpack.c.l.b16 %v80
    %v117 = vunpack.c.l.b16 %v81
    %v118 = vunpack.c.l.b16 %v82
    %v119 = vunpack.c.l.b16 %v83
    %v120 = vunpack.c.l.b16 %v84
    %v121 = vunpack.c.l.b16 %v85
    %v122 = vunpack.c.l.b16 %v86
    %v123 = vunpack.c.l.b16 %v87
    %v124 = vpack.c.b16 %v109, %v108
    %v125 = vpack.c.b16 %v111, %v110
    %v126 = vpack.c.b16 %v113, %v112
    %v127 = vpack.c.b16 %v115, %v114
    %v128 = vpack.c.b16 %v117, %v116
    %v129 = vpack.c.b16 %v119, %v118
    %v130 = vpack.c.b16 %v121, %v120
    %v131 = vpack.c.b16 %v123, %v122
    %v136 = vunpack.c.l.b16 %v88
    %v137 = vunpack.c.l.b16 %v89
    %v138 = vunpack.c.l.b16 %v90
    %v139 = vunpack.c.l.b16 %v91
    %v140 = vpack.c.b16 %v137, %v136
    %v141 = vpack.c.b16 %v139, %v138
    %vm144 = vcmask 261120
    %v146 = vsel %vm144, %v124, 0
    %v149 = vsel %vm144, %v125, 0
    %v152 = vsel %vm144, %v126, 0
    %v155 = vsel %vm144, %v127, 0
    %v158 = vsel %vm144, %v128, 0
    %v161 = vsel %vm144, %v129, 0
    %v164 = vsel %vm144, %v130, 0
    %v167 = vsel %vm144, %v131, 0
    %169 = vmatpush.bf16.msra.mxu0 0
    %170 = vmatpush.bf16.msra.mxu0 0
    %171 = vmatpush.bf16.msra.mxu0 0
    %172 = vmatpush.bf16.msra.mxu0 0
    %173 = vmatpush.bf16.msra.mxu0 0
    %174 = vmatpush.bf16.msra.mxu0 0
    %175 = vmatpush.bf16.msra.mxu0 %v141
    %176 = vmatpush.bf16.msra.mxu0 %v140
    %177 = vmatmul.bf16.gmra.mxu0 %v146
    %v178 = vpop.f32.mrf.mxu0
    %v179 = vadd.f32 0.0, %v178
    %v180 = vpop.f32.mrf.mxu0
    %v181 = vadd.f32 0.0, %v180
    %182 = vmatmul.bf16.gmra.mxu0 %v149
    %v183 = vpop.f32.mrf.mxu0
    %v184 = vadd.f32 0.0, %v183
    %v185 = vpop.f32.mrf.mxu0
    %v186 = vadd.f32 0.0, %v185
    %187 = vmatmul.bf16.gmra.mxu0 %v152
    %v188 = vpop.f32.mrf.mxu0
    %v189 = vadd.f32 0.0, %v188
    %v190 = vpop.f32.mrf.mxu0
    %v191 = vadd.f32 0.0, %v190
    %192 = vmatmul.bf16.gmra.mxu0 %v155
    %v193 = vpop.f32.mrf.mxu0
    %v194 = vadd.f32 0.0, %v193
    %v195 = vpop.f32.mrf.mxu0
    %v196 = vadd.f32 0.0, %v195
    %197 = vmatmul.bf16.gmra.mxu0 %v158
    %v198 = vpop.f32.mrf.mxu0
    %v199 = vadd.f32 0.0, %v198
    %v200 = vpop.f32.mrf.mxu0
    %v201 = vadd.f32 0.0, %v200
    %202 = vmatmul.bf16.gmra.mxu0 %v161
    %v203 = vpop.f32.mrf.mxu0
    %v204 = vadd.f32 0.0, %v203
    %v205 = vpop.f32.mrf.mxu0
    %v206 = vadd.f32 0.0, %v205
    %207 = vmatmul.bf16.gmra.mxu0 %v164
    %v208 = vpop.f32.mrf.mxu0
    %v209 = vadd.f32 0.0, %v208
    %v210 = vpop.f32.mrf.mxu0
    %v211 = vadd.f32 0.0, %v210
    %212 = vmatmul.bf16.gmra.mxu0 %v167
    %v213 = vpop.f32.mrf.mxu0
    %v214 = vadd.f32 0.0, %v213
    %v215 = vpop.f32.mrf.mxu0
    %v216 = vadd.f32 0.0, %v215
    %217 = vdwg.mxu0
    %v218 = vlaneseq
    %v219 = vand.u32 %v218, 127
    %s220 = smul.u32 0, 128
    %v221 = vstv %s220
    %v222 = vadd.s32 %v219, %v221
    %v223 = vld [vmem:[#allocation2] sm:$0xff]
    %v224 = vld [vmem:[#allocation2 + $0x8] sm:$0xff]
    %v225 = vld [vmem:[#allocation2 + $0x10] sm:$0xff]
    %v226 = vld [vmem:[#allocation2 + $0x18] sm:$0xff]
    %v227 = vld [vmem:[#allocation2 + $0x20] sm:$0xff]
    %v228 = vld [vmem:[#allocation2 + $0x28] sm:$0xff]
    %v229 = vld [vmem:[#allocation2 + $0x30] sm:$0xff]
    %v230 = vld [vmem:[#allocation2 + $0x38] sm:$0xff]
    %v231 = vld [vmem:[#allocation2 + $0x40] sm:$0xff]
    %v232 = vld [vmem:[#allocation2 + $0x48] sm:$0xff]
    %v233 = vld [vmem:[#allocation2 + $0x50] sm:$0xff]
    %v234 = vld [vmem:[#allocation2 + $0x58] sm:$0xff]
    %v235 = vld [vmem:[#allocation2 + $0x60] sm:$0xff]
    %v236 = vld [vmem:[#allocation2 + $0x68] sm:$0xff]
    %v237 = vld [vmem:[#allocation2 + $0x70] sm:$0xff]
    %v238 = vld [vmem:[#allocation2 + $0x78] sm:$0xff]
    %239 = vmax.xlane.f32.xlu0 %v179
    %v240 = vpop.xlane.xlu0 %239
    %241 = vmax.xlane.f32.xlu0 %v181
    %v242 = vpop.xlane.xlu0 %241
    %243 = vmax.xlane.f32.xlu0 %v184
    %v244 = vpop.xlane.xlu0 %243
    %245 = vmax.xlane.f32.xlu0 %v186
    %v246 = vpop.xlane.xlu0 %245
    %247 = vmax.xlane.f32.xlu0 %v189
    %v248 = vpop.xlane.xlu0 %247
    %249 = vmax.xlane.f32.xlu0 %v191
    %v250 = vpop.xlane.xlu0 %249
    %251 = vmax.xlane.f32.xlu0 %v194
    %v252 = vpop.xlane.xlu0 %251
    %253 = vmax.xlane.f32.xlu0 %v196
    %v254 = vpop.xlane.xlu0 %253
    %255 = vmax.xlane.f32.xlu0 %v199
    %v256 = vpop.xlane.xlu0 %255
    %257 = vmax.xlane.f32.xlu0 %v201
    %v258 = vpop.xlane.xlu0 %257
    %259 = vmax.xlane.f32.xlu0 %v204
    %v260 = vpop.xlane.xlu0 %259
    %261 = vmax.xlane.f32.xlu0 %v206
    %v262 = vpop.xlane.xlu0 %261
    %263 = vmax.xlane.f32.xlu0 %v209
    %v264 = vpop.xlane.xlu0 %263
    %265 = vmax.xlane.f32.xlu0 %v211
    %v266 = vpop.xlane.xlu0 %265
    %267 = vmax.xlane.f32.xlu0 %v214
    %v268 = vpop.xlane.xlu0 %267
    %269 = vmax.xlane.f32.xlu0 %v216
    %v270 = vpop.xlane.xlu0 %269
    %v271 = vmax.f32 %v223, %v240
    %v272 = vmax.f32 %v224, %v242
    %v273 = vmax.f32 %v225, %v244
    %v274 = vmax.f32 %v226, %v246
    %v275 = vmax.f32 %v227, %v248
    %v276 = vmax.f32 %v228, %v250
    %v277 = vmax.f32 %v229, %v252
    %v278 = vmax.f32 %v230, %v254
    %v279 = vmax.f32 %v231, %v256
    %v280 = vmax.f32 %v232, %v258
    %v281 = vmax.f32 %v233, %v260
    %v282 = vmax.f32 %v234, %v262
    %v283 = vmax.f32 %v235, %v264
    %v284 = vmax.f32 %v236, %v266
    %v285 = vmax.f32 %v237, %v268
    %v286 = vmax.f32 %v238, %v270
    %v287 = vsub.f32 %v223, %v271
    %v288 = vsub.f32 %v224, %v272
    %v289 = vsub.f32 %v225, %v273
    %v290 = vsub.f32 %v226, %v274
    %v291 = vsub.f32 %v227, %v275
    %v292 = vsub.f32 %v228, %v276
    %v293 = vsub.f32 %v229, %v277
    %v294 = vsub.f32 %v230, %v278
    %v295 = vsub.f32 %v231, %v279
    %v296 = vsub.f32 %v232, %v280
    %v297 = vsub.f32 %v233, %v281
    %v298 = vsub.f32 %v234, %v282
    %v299 = vsub.f32 %v235, %v283
    %v300 = vsub.f32 %v236, %v284
    %v301 = vsub.f32 %v237, %v285
    %v302 = vsub.f32 %v238, %v286
    %v303 = vmul.f32 %v287, 1.442695
    %v304 = vpow.pop %v303
    %v305 = vmul.f32 %v288, 1.442695
    %v306 = vpow.pop %v305
    %v307 = vmul.f32 %v289, 1.442695
    %v308 = vpow.pop %v307
    %v309 = vmul.f32 %v290, 1.442695
    %v310 = vpow.pop %v309
    %v311 = vmul.f32 %v291, 1.442695
    %v312 = vpow.pop %v311
    %v313 = vmul.f32 %v292, 1.442695
    %v314 = vpow.pop %v313
    %v315 = vmul.f32 %v293, 1.442695
    %v316 = vpow.pop %v315
    %v317 = vmul.f32 %v294, 1.442695
    %v318 = vpow.pop %v317
    %v319 = vmul.f32 %v295, 1.442695
    %v320 = vpow.pop %v319
    %v321 = vmul.f32 %v296, 1.442695
    %v322 = vpow.pop %v321
    %v323 = vmul.f32 %v297, 1.442695
    %v324 = vpow.pop %v323
    %v325 = vmul.f32 %v298, 1.442695
    %v326 = vpow.pop %v325
    %v327 = vmul.f32 %v299, 1.442695
    %v328 = vpow.pop %v327
    %v329 = vmul.f32 %v300, 1.442695
    %v330 = vpow.pop %v329
    %v331 = vmul.f32 %v301, 1.442695
    %v332 = vpow.pop %v331
    %v333 = vmul.f32 %v302, 1.442695
    %v334 = vpow.pop %v333
    %v335 = vld [vmem:[#allocation3] sm:$0xff]
    %v336 = vld [vmem:[#allocation3 + $0x8] sm:$0xff]
    %v337 = vld [vmem:[#allocation3 + $0x10] sm:$0xff]
    %v338 = vld [vmem:[#allocation3 + $0x18] sm:$0xff]
    %v339 = vld [vmem:[#allocation3 + $0x20] sm:$0xff]
    %v340 = vld [vmem:[#allocation3 + $0x28] sm:$0xff]
    %v341 = vld [vmem:[#allocation3 + $0x30] sm:$0xff]
    %v342 = vld [vmem:[#allocation3 + $0x38] sm:$0xff]
    %v343 = vld [vmem:[#allocation3 + $0x40] sm:$0xff]
    %v344 = vld [vmem:[#allocation3 + $0x48] sm:$0xff]
    %v345 = vld [vmem:[#allocation3 + $0x50] sm:$0xff]
    %v346 = vld [vmem:[#allocation3 + $0x58] sm:$0xff]
    %v347 = vld [vmem:[#allocation3 + $0x60] sm:$0xff]
    %v348 = vld [vmem:[#allocation3 + $0x68] sm:$0xff]
    %v349 = vld [vmem:[#allocation3 + $0x70] sm:$0xff]
    %v350 = vld [vmem:[#allocation3 + $0x78] sm:$0xff]
    %v351 = vmul.f32 %v335, %v304
    %v352 = vmul.f32 %v336, %v306
    %v353 = vmul.f32 %v337, %v308
    %v354 = vmul.f32 %v338, %v310
    %v355 = vmul.f32 %v339, %v312
    %v356 = vmul.f32 %v340, %v314
    %v357 = vmul.f32 %v341, %v316
    %v358 = vmul.f32 %v342, %v318
    %v359 = vmul.f32 %v343, %v320
    %v360 = vmul.f32 %v344, %v322
    %v361 = vmul.f32 %v345, %v324
    %v362 = vmul.f32 %v346, %v326
    %v363 = vmul.f32 %v347, %v328
    %v364 = vmul.f32 %v348, %v330
    %v365 = vmul.f32 %v349, %v332
    %v366 = vmul.f32 %v350, %v334
    %368 = vset.pattern.permute.xlu0 0
    %369 = vperm.xlu0 %368, %v271
    %v370 = vpop.permute.xlu0 %369
    %373 = vset.pattern.permute.xlu0 0
    %374 = vperm.xlu0 %373, %v272
    %v375 = vpop.permute.xlu0 %374
    %378 = vset.pattern.permute.xlu0 0
    %379 = vperm.xlu0 %378, %v273
    %v380 = vpop.permute.xlu0 %379
    %383 = vset.pattern.permute.xlu0 0
    %384 = vperm.xlu0 %383, %v274
    %v385 = vpop.permute.xlu0 %384
    %388 = vset.pattern.permute.xlu0 0
    %389 = vperm.xlu0 %388, %v275
    %v390 = vpop.permute.xlu0 %389
    %393 = vset.pattern.permute.xlu0 0
    %394 = vperm.xlu0 %393, %v276
    %v395 = vpop.permute.xlu0 %394
    %398 = vset.pattern.permute.xlu0 0
    %399 = vperm.xlu0 %398, %v277
    %v400 = vpop.permute.xlu0 %399
    %403 = vset.pattern.permute.xlu0 0
    %404 = vperm.xlu0 %403, %v278
    %v405 = vpop.permute.xlu0 %404
    %408 = vset.pattern.permute.xlu0 0
    %409 = vperm.xlu0 %408, %v279
    %v410 = vpop.permute.xlu0 %409
    %413 = vset.pattern.permute.xlu0 0
    %414 = vperm.xlu0 %413, %v280
    %v415 = vpop.permute.xlu0 %414
    %418 = vset.pattern.permute.xlu0 0
    %419 = vperm.xlu0 %418, %v281
    %v420 = vpop.permute.xlu0 %419
    %423 = vset.pattern.permute.xlu0 0
    %424 = vperm.xlu0 %423, %v282
    %v425 = vpop.permute.xlu0 %424
    %428 = vset.pattern.permute.xlu0 0
    %429 = vperm.xlu0 %428, %v283
    %v430 = vpop.permute.xlu0 %429
    %433 = vset.pattern.permute.xlu0 0
    %434 = vperm.xlu0 %433, %v284
    %v435 = vpop.permute.xlu0 %434
    %438 = vset.pattern.permute.xlu0 0
    %439 = vperm.xlu0 %438, %v285
    %v440 = vpop.permute.xlu0 %439
    %443 = vset.pattern.permute.xlu0 0
    %444 = vperm.xlu0 %443, %v286
    %v445 = vpop.permute.xlu0 %444
    %v447 = vsub.f32 %v179, %v370
    %v448 = vsub.f32 %v181, %v375
    %v449 = vsub.f32 %v184, %v380
    %v450 = vsub.f32 %v186, %v385
    %v451 = vsub.f32 %v189, %v390
    %v452 = vsub.f32 %v191, %v395
    %v453 = vsub.f32 %v194, %v400
    %v454 = vsub.f32 %v196, %v405
    %v455 = vsub.f32 %v199, %v410
    %v456 = vsub.f32 %v201, %v415
    %v457 = vsub.f32 %v204, %v420
    %v458 = vsub.f32 %v206, %v425
    %v459 = vsub.f32 %v209, %v430
    %v460 = vsub.f32 %v211, %v435
    %v461 = vsub.f32 %v214, %v440
    %v462 = vsub.f32 %v216, %v445
    %v463 = vmul.f32 %v447, 1.442695
    %v464 = vpow.pop %v463
    %v465 = vmul.f32 %v448, 1.442695
    %v466 = vpow.pop %v465
    %v467 = vmul.f32 %v449, 1.442695
    %v468 = vpow.pop %v467
    %v469 = vmul.f32 %v450, 1.442695
    %v470 = vpow.pop %v469
    %v471 = vmul.f32 %v451, 1.442695
    %v472 = vpow.pop %v471
    %v473 = vmul.f32 %v452, 1.442695
    %v474 = vpow.pop %v473
    %v475 = vmul.f32 %v453, 1.442695
    %v476 = vpow.pop %v475
    %v477 = vmul.f32 %v454, 1.442695
    %v478 = vpow.pop %v477
    %v479 = vmul.f32 %v455, 1.442695
    %v480 = vpow.pop %v479
    %v481 = vmul.f32 %v456, 1.442695
    %v482 = vpow.pop %v481
    %v483 = vmul.f32 %v457, 1.442695
    %v484 = vpow.pop %v483
    %v485 = vmul.f32 %v458, 1.442695
    %v486 = vpow.pop %v485
    %v487 = vmul.f32 %v459, 1.442695
    %v488 = vpow.pop %v487
    %v489 = vmul.f32 %v460, 1.442695
    %v490 = vpow.pop %v489
    %v491 = vmul.f32 %v461, 1.442695
    %v492 = vpow.pop %v491
    %v493 = vmul.f32 %v462, 1.442695
    %v494 = vpow.pop %v493
    %495 = vadd.xlane.f32.xlu0 %v464
    %v496 = vpop.xlane.xlu0 %495
    %497 = vadd.xlane.f32.xlu0 %v466
    %v498 = vpop.xlane.xlu0 %497
    %499 = vadd.xlane.f32.xlu0 %v468
    %v500 = vpop.xlane.xlu0 %499
    %501 = vadd.xlane.f32.xlu0 %v470
    %v502 = vpop.xlane.xlu0 %501
    %503 = vadd.xlane.f32.xlu0 %v472
    %v504 = vpop.xlane.xlu0 %503
    %505 = vadd.xlane.f32.xlu0 %v474
    %v506 = vpop.xlane.xlu0 %505
    %507 = vadd.xlane.f32.xlu0 %v476
    %v508 = vpop.xlane.xlu0 %507
    %509 = vadd.xlane.f32.xlu0 %v478
    %v510 = vpop.xlane.xlu0 %509
    %511 = vadd.xlane.f32.xlu0 %v480
    %v512 = vpop.xlane.xlu0 %511
    %513 = vadd.xlane.f32.xlu0 %v482
    %v514 = vpop.xlane.xlu0 %513
    %515 = vadd.xlane.f32.xlu0 %v484
    %v516 = vpop.xlane.xlu0 %515
    %517 = vadd.xlane.f32.xlu0 %v486
    %v518 = vpop.xlane.xlu0 %517
    %519 = vadd.xlane.f32.xlu0 %v488
    %v520 = vpop.xlane.xlu0 %519
    %521 = vadd.xlane.f32.xlu0 %v490
    %v522 = vpop.xlane.xlu0 %521
    %523 = vadd.xlane.f32.xlu0 %v492
    %v524 = vpop.xlane.xlu0 %523
    %525 = vadd.xlane.f32.xlu0 %v494
    %v526 = vpop.xlane.xlu0 %525
    %v527 = vadd.f32 %v351, %v496
    %v528 = vadd.f32 %v352, %v498
    %v529 = vadd.f32 %v353, %v500
    %v530 = vadd.f32 %v354, %v502
    %v531 = vadd.f32 %v355, %v504
    %v532 = vadd.f32 %v356, %v506
    %v533 = vadd.f32 %v357, %v508
    %v534 = vadd.f32 %v358, %v510
    %v535 = vadd.f32 %v359, %v512
    %v536 = vadd.f32 %v360, %v514
    %v537 = vadd.f32 %v361, %v516
    %v538 = vadd.f32 %v362, %v518
    %v539 = vadd.f32 %v363, %v520
    %v540 = vadd.f32 %v364, %v522
    %v541 = vadd.f32 %v365, %v524
    %v542 = vadd.f32 %v366, %v526
    %v543 = vld [vmem:[%s2] sm:$0xff]
    %v544 = vld [vmem:[%s2 + $0x8] sm:$0xff]
    %v545 = vld [vmem:[%s2 + $0x10] sm:$0xff]
    %v546 = vld [vmem:[%s2 + $0x18] sm:$0xff]
    %v547 = vld [vmem:[%s2 + $0x20] sm:$0xff]
    %v548 = vld [vmem:[%s2 + $0x28] sm:$0xff]
    %v549 = vld [vmem:[%s2 + $0x30] sm:$0xff]
    %v550 = vld [vmem:[%s2 + $0x38] sm:$0xff]
    %v551 = vld [vmem:[%s2 + $0x40] sm:$0xff]
    %v552 = vld [vmem:[%s2 + $0x48] sm:$0xff]
    %v553 = vld [vmem:[%s2 + $0x50] sm:$0xff]
    %v554 = vld [vmem:[%s2 + $0x58] sm:$0xff]
    %v555 = vld [vmem:[%s2 + $0x60] sm:$0xff]
    %v556 = vld [vmem:[%s2 + $0x68] sm:$0xff]
    %v557 = vld [vmem:[%s2 + $0x70] sm:$0xff]
    %v558 = vld [vmem:[%s2 + $0x78] sm:$0xff]
    %559 = vset.pattern.permute.xlu0 0
    %560 = vperm.xlu0 %559, %v543
    %v561 = vpop.permute.xlu0 %560
    %562 = vset.pattern.permute.xlu0 0
    %563 = vperm.xlu0 %562, %v544
    %v564 = vpop.permute.xlu0 %563
    %565 = vset.pattern.permute.xlu0 0
    %566 = vperm.xlu0 %565, %v545
    %v567 = vpop.permute.xlu0 %566
    %568 = vset.pattern.permute.xlu0 0
    %569 = vperm.xlu0 %568, %v546
    %v570 = vpop.permute.xlu0 %569
    %571 = vset.pattern.permute.xlu0 0
    %572 = vperm.xlu0 %571, %v547
    %v573 = vpop.permute.xlu0 %572
    %574 = vset.pattern.permute.xlu0 0
    %575 = vperm.xlu0 %574, %v548
    %v576 = vpop.permute.xlu0 %575
    %577 = vset.pattern.permute.xlu0 0
    %578 = vperm.xlu0 %577, %v549
    %v579 = vpop.permute.xlu0 %578
    %580 = vset.pattern.permute.xlu0 0
    %581 = vperm.xlu0 %580, %v550
    %v582 = vpop.permute.xlu0 %581
    %583 = vset.pattern.permute.xlu0 0
    %584 = vperm.xlu0 %583, %v551
    %v585 = vpop.permute.xlu0 %584
    %586 = vset.pattern.permute.xlu0 0
    %587 = vperm.xlu0 %586, %v552
    %v588 = vpop.permute.xlu0 %587
    %589 = vset.pattern.permute.xlu0 0
    %590 = vperm.xlu0 %589, %v553
    %v591 = vpop.permute.xlu0 %590
    %592 = vset.pattern.permute.xlu0 0
    %593 = vperm.xlu0 %592, %v554
    %v594 = vpop.permute.xlu0 %593
    %595 = vset.pattern.permute.xlu0 0
    %596 = vperm.xlu0 %595, %v555
    %v597 = vpop.permute.xlu0 %596
    %598 = vset.pattern.permute.xlu0 0
    %599 = vperm.xlu0 %598, %v556
    %v600 = vpop.permute.xlu0 %599
    %601 = vset.pattern.permute.xlu0 0
    %602 = vperm.xlu0 %601, %v557
    %v603 = vpop.permute.xlu0 %602
    %604 = vset.pattern.permute.xlu0 0
    %605 = vperm.xlu0 %604, %v558
    %v606 = vpop.permute.xlu0 %605
    %vm607 = vcmp.eq.s32.totalorder %v222, %v561
    %vm608 = vcmp.eq.s32.totalorder %v222, %v564
    %vm609 = vcmp.eq.s32.totalorder %v222, %v567
    %vm610 = vcmp.eq.s32.totalorder %v222, %v570
    %vm611 = vcmp.eq.s32.totalorder %v222, %v573
    %vm612 = vcmp.eq.s32.totalorder %v222, %v576
    %vm613 = vcmp.eq.s32.totalorder %v222, %v579
    %vm614 = vcmp.eq.s32.totalorder %v222, %v582
    %vm615 = vcmp.eq.s32.totalorder %v222, %v585
    %vm616 = vcmp.eq.s32.totalorder %v222, %v588
    %vm617 = vcmp.eq.s32.totalorder %v222, %v591
    %vm618 = vcmp.eq.s32.totalorder %v222, %v594
    %vm619 = vcmp.eq.s32.totalorder %v222, %v597
    %vm620 = vcmp.eq.s32.totalorder %v222, %v600
    %vm621 = vcmp.eq.s32.totalorder %v222, %v603
    %vm622 = vcmp.eq.s32.totalorder %v222, %v606
    %v623 = vsel %vm607, %v179, 0.0
    %v624 = vsel %vm608, %v181, 0.0
    %v625 = vsel %vm609, %v184, 0.0
    %v626 = vsel %vm610, %v186, 0.0
    %v627 = vsel %vm611, %v189, 0.0
    %v628 = vsel %vm612, %v191, 0.0
    %v629 = vsel %vm613, %v194, 0.0
    %v630 = vsel %vm614, %v196, 0.0
    %v631 = vsel %vm615, %v199, 0.0
    %v632 = vsel %vm616, %v201, 0.0
    %v633 = vsel %vm617, %v204, 0.0
    %v634 = vsel %vm618, %v206, 0.0
    %v635 = vsel %vm619, %v209, 0.0
    %v636 = vsel %vm620, %v211, 0.0
    %v637 = vsel %vm621, %v214, 0.0
    %v638 = vsel %vm622, %v216, 0.0
    %639 = vadd.xlane.f32.xlu0 %v623
    %v640 = vpop.xlane.xlu0 %639
    %641 = vadd.xlane.f32.xlu0 %v624
    %v642 = vpop.xlane.xlu0 %641
    %643 = vadd.xlane.f32.xlu0 %v625
    %v644 = vpop.xlane.xlu0 %643
    %645 = vadd.xlane.f32.xlu0 %v626
    %v646 = vpop.xlane.xlu0 %645
    %647 = vadd.xlane.f32.xlu0 %v627
    %v648 = vpop.xlane.xlu0 %647
    %649 = vadd.xlane.f32.xlu0 %v628
    %v650 = vpop.xlane.xlu0 %649
    %651 = vadd.xlane.f32.xlu0 %v629
    %v652 = vpop.xlane.xlu0 %651
    %653 = vadd.xlane.f32.xlu0 %v630
    %v654 = vpop.xlane.xlu0 %653
    %655 = vadd.xlane.f32.xlu0 %v631
    %v656 = vpop.xlane.xlu0 %655
    %657 = vadd.xlane.f32.xlu0 %v632
    %v658 = vpop.xlane.xlu0 %657
    %659 = vadd.xlane.f32.xlu0 %v633
    %v660 = vpop.xlane.xlu0 %659
    %661 = vadd.xlane.f32.xlu0 %v634
    %v662 = vpop.xlane.xlu0 %661
    %663 = vadd.xlane.f32.xlu0 %v635
    %v664 = vpop.xlane.xlu0 %663
    %665 = vadd.xlane.f32.xlu0 %v636
    %v666 = vpop.xlane.xlu0 %665
    %667 = vadd.xlane.f32.xlu0 %v637
    %v668 = vpop.xlane.xlu0 %667
    %669 = vadd.xlane.f32.xlu0 %v638
    %v670 = vpop.xlane.xlu0 %669
    %vm671 = vcmask 7168
    %672 = vst.msk [vmem:[#allocation2] sm:$0xff] %vm671, %v271
    %673 = vst.msk [vmem:[#allocation2 + $0x8] sm:$0xff] %vm671, %v272
    %674 = vst.msk [vmem:[#allocation2 + $0x10] sm:$0xff] %vm671, %v273
    %675 = vst.msk [vmem:[#allocation2 + $0x18] sm:$0xff] %vm671, %v274
    %676 = vst.msk [vmem:[#allocation2 + $0x20] sm:$0xff] %vm671, %v275
    %677 = vst.msk [vmem:[#allocation2 + $0x28] sm:$0xff] %vm671, %v276
    %678 = vst.msk [vmem:[#allocation2 + $0x30] sm:$0xff] %vm671, %v277
    %679 = vst.msk [vmem:[#allocation2 + $0x38] sm:$0xff] %vm671, %v278
    %680 = vst.msk [vmem:[#allocation2 + $0x40] sm:$0xff] %vm671, %v279
    %681 = vst.msk [vmem:[#allocation2 + $0x48] sm:$0xff] %vm671, %v280
    %682 = vst.msk [vmem:[#allocation2 + $0x50] sm:$0xff] %vm671, %v281
    %683 = vst.msk [vmem:[#allocation2 + $0x58] sm:$0xff] %vm671, %v282
    %684 = vst.msk [vmem:[#allocation2 + $0x60] sm:$0xff] %vm671, %v283
    %685 = vst.msk [vmem:[#allocation2 + $0x68] sm:$0xff] %vm671, %v284
    %686 = vst.msk [vmem:[#allocation2 + $0x70] sm:$0xff] %vm671, %v285
    %687 = vst.msk [vmem:[#allocation2 + $0x78] sm:$0xff] %vm671, %v286
    %688 = vst.msk [vmem:[#allocation3] sm:$0xff] %vm671, %v527
    %689 = vst.msk [vmem:[#allocation3 + $0x8] sm:$0xff] %vm671, %v528
    %690 = vst.msk [vmem:[#allocation3 + $0x10] sm:$0xff] %vm671, %v529
    %691 = vst.msk [vmem:[#allocation3 + $0x18] sm:$0xff] %vm671, %v530
    %692 = vst.msk [vmem:[#allocation3 + $0x20] sm:$0xff] %vm671, %v531
    %693 = vst.msk [vmem:[#allocation3 + $0x28] sm:$0xff] %vm671, %v532
    %694 = vst.msk [vmem:[#allocation3 + $0x30] sm:$0xff] %vm671, %v533
    %695 = vst.msk [vmem:[#allocation3 + $0x38] sm:$0xff] %vm671, %v534
    %696 = vst.msk [vmem:[#allocation3 + $0x40] sm:$0xff] %vm671, %v535
    %697 = vst.msk [vmem:[#allocation3 + $0x48] sm:$0xff] %vm671, %v536
    %698 = vst.msk [vmem:[#allocation3 + $0x50] sm:$0xff] %vm671, %v537
    %699 = vst.msk [vmem:[#allocation3 + $0x58] sm:$0xff] %vm671, %v538
    %700 = vst.msk [vmem:[#allocation3 + $0x60] sm:$0xff] %vm671, %v539
    %701 = vst.msk [vmem:[#allocation3 + $0x68] sm:$0xff] %vm671, %v540
    %702 = vst.msk [vmem:[#allocation3 + $0x70] sm:$0xff] %vm671, %v541
    %703 = vst.msk [vmem:[#allocation3 + $0x78] sm:$0xff] %vm671, %v542
    %v704 = vld [vmem:[#allocation4] sm:$0xff]
    %v705 = vld [vmem:[#allocation4 + $0x8] sm:$0xff]
    %v706 = vld [vmem:[#allocation4 + $0x10] sm:$0xff]
    %v707 = vld [vmem:[#allocation4 + $0x18] sm:$0xff]
    %v708 = vld [vmem:[#allocation4 + $0x20] sm:$0xff]
    %v709 = vld [vmem:[#allocation4 + $0x28] sm:$0xff]
    %v710 = vld [vmem:[#allocation4 + $0x30] sm:$0xff]
    %v711 = vld [vmem:[#allocation4 + $0x38] sm:$0xff]
    %v712 = vld [vmem:[#allocation4 + $0x40] sm:$0xff]
    %v713 = vld [vmem:[#allocation4 + $0x48] sm:$0xff]
    %v714 = vld [vmem:[#allocation4 + $0x50] sm:$0xff]
    %v715 = vld [vmem:[#allocation4 + $0x58] sm:$0xff]
    %v716 = vld [vmem:[#allocation4 + $0x60] sm:$0xff]
    %v717 = vld [vmem:[#allocation4 + $0x68] sm:$0xff]
    %v718 = vld [vmem:[#allocation4 + $0x70] sm:$0xff]
    %v719 = vld [vmem:[#allocation4 + $0x78] sm:$0xff]
    %v720 = vadd.f32 %v704, %v640
    %v721 = vadd.f32 %v705, %v642
    %v722 = vadd.f32 %v706, %v644
    %v723 = vadd.f32 %v707, %v646
    %v724 = vadd.f32 %v708, %v648
    %v725 = vadd.f32 %v709, %v650
    %v726 = vadd.f32 %v710, %v652
    %v727 = vadd.f32 %v711, %v654
    %v728 = vadd.f32 %v712, %v656
    %v729 = vadd.f32 %v713, %v658
    %v730 = vadd.f32 %v714, %v660
    %v731 = vadd.f32 %v715, %v662
    %v732 = vadd.f32 %v716, %v664
    %v733 = vadd.f32 %v717, %v666
    %v734 = vadd.f32 %v718, %v668
    %v735 = vadd.f32 %v719, %v670
    %736 = vst.msk [vmem:[#allocation4] sm:$0xff] %vm671, %v720
    %737 = vst.msk [vmem:[#allocation4 + $0x8] sm:$0xff] %vm671, %v721
    %738 = vst.msk [vmem:[#allocation4 + $0x10] sm:$0xff] %vm671, %v722
    %739 = vst.msk [vmem:[#allocation4 + $0x18] sm:$0xff] %vm671, %v723
    %740 = vst.msk [vmem:[#allocation4 + $0x20] sm:$0xff] %vm671, %v724
    %741 = vst.msk [vmem:[#allocation4 + $0x28] sm:$0xff] %vm671, %v725
    %742 = vst.msk [vmem:[#allocation4 + $0x30] sm:$0xff] %vm671, %v726
    %743 = vst.msk [vmem:[#allocation4 + $0x38] sm:$0xff] %vm671, %v727
    %744 = vst.msk [vmem:[#allocation4 + $0x40] sm:$0xff] %vm671, %v728
    %745 = vst.msk [vmem:[#allocation4 + $0x48] sm:$0xff] %vm671, %v729
    %746 = vst.msk [vmem:[#allocation4 + $0x50] sm:$0xff] %vm671, %v730
    %747 = vst.msk [vmem:[#allocation4 + $0x58] sm:$0xff] %vm671, %v731
    %748 = vst.msk [vmem:[#allocation4 + $0x60] sm:$0xff] %vm671, %v732
    %749 = vst.msk [vmem:[#allocation4 + $0x68] sm:$0xff] %vm671, %v733
    %750 = vst.msk [vmem:[#allocation4 + $0x70] sm:$0xff] %vm671, %v734
    %751 = vst.msk [vmem:[#allocation4 + $0x78] sm:$0xff] %vm671, %v735
    // Predicated region
    $region22: #{tpu_custom_call.1} parent=1 // pred_check
      %p752 = pneg %p19
    $region23: #{tpu_custom_call.1} parent=1 // pred_check_branch
      %754 = sbr.rel (%p752) target = $region25
    $region24: #{tpu_custom_call.1} parent=1 // pred_region
      %v755 = vld [vmem:[#allocation2] sm:$0xff]
      %v756 = vld [vmem:[#allocation2 + $0x8] sm:$0xff]
      %v757 = vld [vmem:[#allocation2 + $0x10] sm:$0xff]
      %v758 = vld [vmem:[#allocation2 + $0x18] sm:$0xff]
      %v759 = vld [vmem:[#allocation2 + $0x20] sm:$0xff]
      %v760 = vld [vmem:[#allocation2 + $0x28] sm:$0xff]
      %v761 = vld [vmem:[#allocation2 + $0x30] sm:$0xff]
      %v762 = vld [vmem:[#allocation2 + $0x38] sm:$0xff]
      %v763 = vld [vmem:[#allocation2 + $0x40] sm:$0xff]
      %v764 = vld [vmem:[#allocation2 + $0x48] sm:$0xff]
      %v765 = vld [vmem:[#allocation2 + $0x50] sm:$0xff]
      %v766 = vld [vmem:[#allocation2 + $0x58] sm:$0xff]
      %v767 = vld [vmem:[#allocation2 + $0x60] sm:$0xff]
      %v768 = vld [vmem:[#allocation2 + $0x68] sm:$0xff]
      %v769 = vld [vmem:[#allocation2 + $0x70] sm:$0xff]
      %v770 = vld [vmem:[#allocation2 + $0x78] sm:$0xff]
      %v771 = vld [vmem:[#allocation3] sm:$0xff]
      %v772 = vld [vmem:[#allocation3 + $0x8] sm:$0xff]
      %v773 = vld [vmem:[#allocation3 + $0x10] sm:$0xff]
      %v774 = vld [vmem:[#allocation3 + $0x18] sm:$0xff]
      %v775 = vld [vmem:[#allocation3 + $0x20] sm:$0xff]
      %v776 = vld [vmem:[#allocation3 + $0x28] sm:$0xff]
      %v777 = vld [vmem:[#allocation3 + $0x30] sm:$0xff]
      %v778 = vld [vmem:[#allocation3 + $0x38] sm:$0xff]
      %v779 = vld [vmem:[#allocation3 + $0x40] sm:$0xff]
      %v780 = vld [vmem:[#allocation3 + $0x48] sm:$0xff]
      %v781 = vld [vmem:[#allocation3 + $0x50] sm:$0xff]
      %v782 = vld [vmem:[#allocation3 + $0x58] sm:$0xff]
      %v783 = vld [vmem:[#allocation3 + $0x60] sm:$0xff]
      %v784 = vld [vmem:[#allocation3 + $0x68] sm:$0xff]
      %v785 = vld [vmem:[#allocation3 + $0x70] sm:$0xff]
      %v786 = vld [vmem:[#allocation3 + $0x78] sm:$0xff]
      %v787 = vlog2.pop %v771
      %v788 = vmul.f32 %v787, 0.6931472
      %v789 = vlog2.pop %v772
      %v790 = vmul.f32 %v789, 0.6931472
      %v791 = vlog2.pop %v773
      %v792 = vmul.f32 %v791, 0.6931472
      %v793 = vlog2.pop %v774
      %v794 = vmul.f32 %v793, 0.6931472
      %v795 = vlog2.pop %v775
      %v796 = vmul.f32 %v795, 0.6931472
      %v797 = vlog2.pop %v776
      %v798 = vmul.f32 %v797, 0.6931472
      %v799 = vlog2.pop %v777
      %v800 = vmul.f32 %v799, 0.6931472
      %v801 = vlog2.pop %v778
      %v802 = vmul.f32 %v801, 0.6931472
      %v803 = vlog2.pop %v779
      %v804 = vmul.f32 %v803, 0.6931472
      %v805 = vlog2.pop %v780
      %v806 = vmul.f32 %v805, 0.6931472
      %v807 = vlog2.pop %v781
      %v808 = vmul.f32 %v807, 0.6931472
      %v809 = vlog2.pop %v782
      %v810 = vmul.f32 %v809, 0.6931472
      %v811 = vlog2.pop %v783
      %v812 = vmul.f32 %v811, 0.6931472
      %v813 = vlog2.pop %v784
      %v814 = vmul.f32 %v813, 0.6931472
      %v815 = vlog2.pop %v785
      %v816 = vmul.f32 %v815, 0.6931472
      %v817 = vlog2.pop %v786
      %v818 = vmul.f32 %v817, 0.6931472
      %v819 = vadd.f32 %v755, %v788
      %v820 = vadd.f32 %v756, %v790
      %v821 = vadd.f32 %v757, %v792
      %v822 = vadd.f32 %v758, %v794
      %v823 = vadd.f32 %v759, %v796
      %v824 = vadd.f32 %v760, %v798
      %v825 = vadd.f32 %v761, %v800
      %v826 = vadd.f32 %v762, %v802
      %v827 = vadd.f32 %v763, %v804
      %v828 = vadd.f32 %v764, %v806
      %v829 = vadd.f32 %v765, %v808
      %v830 = vadd.f32 %v766, %v810
      %v831 = vadd.f32 %v767, %v812
      %v832 = vadd.f32 %v768, %v814
      %v833 = vadd.f32 %v769, %v816
      %v834 = vadd.f32 %v770, %v818
      %v835 = vld [vmem:[%s3] sm:$0xff]
      %v836 = vld [vmem:[%s3 + $0x8] sm:$0xff]
      %v837 = vld [vmem:[%s3 + $0x10] sm:$0xff]
      %v838 = vld [vmem:[%s3 + $0x18] sm:$0xff]
      %v839 = vld [vmem:[%s3 + $0x20] sm:$0xff]
      %v840 = vld [vmem:[%s3 + $0x28] sm:$0xff]
      %v841 = vld [vmem:[%s3 + $0x30] sm:$0xff]
      %v842 = vld [vmem:[%s3 + $0x38] sm:$0xff]
      %v843 = vld [vmem:[%s3 + $0x40] sm:$0xff]
      %v844 = vld [vmem:[%s3 + $0x48] sm:$0xff]
      %v845 = vld [vmem:[%s3 + $0x50] sm:$0xff]
      %v846 = vld [vmem:[%s3 + $0x58] sm:$0xff]
      %v847 = vld [vmem:[%s3 + $0x60] sm:$0xff]
      %v848 = vld [vmem:[%s3 + $0x68] sm:$0xff]
      %v849 = vld [vmem:[%s3 + $0x70] sm:$0xff]
      %v850 = vld [vmem:[%s3 + $0x78] sm:$0xff]
      %v851 = vld [vmem:[#allocation4] sm:$0xff]
      %v852 = vld [vmem:[#allocation4 + $0x8] sm:$0xff]
      %v853 = vld [vmem:[#allocation4 + $0x10] sm:$0xff]
      %v854 = vld [vmem:[#allocation4 + $0x18] sm:$0xff]
      %v855 = vld [vmem:[#allocation4 + $0x20] sm:$0xff]
      %v856 = vld [vmem:[#allocation4 + $0x28] sm:$0xff]
      %v857 = vld [vmem:[#allocation4 + $0x30] sm:$0xff]
      %v858 = vld [vmem:[#allocation4 + $0x38] sm:$0xff]
      %v859 = vld [vmem:[#allocation4 + $0x40] sm:$0xff]
      %v860 = vld [vmem:[#allocation4 + $0x48] sm:$0xff]
      %v861 = vld [vmem:[#allocation4 + $0x50] sm:$0xff]
      %v862 = vld [vmem:[#allocation4 + $0x58] sm:$0xff]
      %v863 = vld [vmem:[#allocation4 + $0x60] sm:$0xff]
      %v864 = vld [vmem:[#allocation4 + $0x68] sm:$0xff]
      %v865 = vld [vmem:[#allocation4 + $0x70] sm:$0xff]
      %v866 = vld [vmem:[#allocation4 + $0x78] sm:$0xff]
      %v867 = vsub.f32 %v851, %v819
      %v868 = vsub.f32 %v852, %v820
      %v869 = vsub.f32 %v853, %v821
      %v870 = vsub.f32 %v854, %v822
      %v871 = vsub.f32 %v855, %v823
      %v872 = vsub.f32 %v856, %v824
      %v873 = vsub.f32 %v857, %v825
      %v874 = vsub.f32 %v858, %v826
      %v875 = vsub.f32 %v859, %v827
      %v876 = vsub.f32 %v860, %v828
      %v877 = vsub.f32 %v861, %v829
      %v878 = vsub.f32 %v862, %v830
      %v879 = vsub.f32 %v863, %v831
      %v880 = vsub.f32 %v864, %v832
      %v881 = vsub.f32 %v865, %v833
      %v882 = vsub.f32 %v866, %v834
      %v883 = vmul.f32 %v835, %v867
      %v884 = vmul.f32 %v836, %v868
      %v885 = vmul.f32 %v837, %v869
      %v886 = vmul.f32 %v838, %v870
      %v887 = vmul.f32 %v839, %v871
      %v888 = vmul.f32 %v840, %v872
      %v889 = vmul.f32 %v841, %v873
      %v890 = vmul.f32 %v842, %v874
      %v891 = vmul.f32 %v843, %v875
      %v892 = vmul.f32 %v844, %v876
      %v893 = vmul.f32 %v845, %v877
      %v894 = vmul.f32 %v846, %v878
      %v895 = vmul.f32 %v847, %v879
      %v896 = vmul.f32 %v848, %v880
      %v897 = vmul.f32 %v849, %v881
      %v898 = vmul.f32 %v850, %v882
      %900 = vset.pattern.permute.xlu0 0
      %901 = vperm.xlu0 %900, %v883
      %v902 = vpop.permute.xlu0 %901
      %905 = vset.pattern.permute.xlu0 0
      %906 = vperm.xlu0 %905, %v884
      %v907 = vpop.permute.xlu0 %906
      %910 = vset.pattern.permute.xlu0 0
      %911 = vperm.xlu0 %910, %v885
      %v912 = vpop.permute.xlu0 %911
      %915 = vset.pattern.permute.xlu0 0
      %916 = vperm.xlu0 %915, %v886
      %v917 = vpop.permute.xlu0 %916
      %920 = vset.pattern.permute.xlu0 0
      %921 = vperm.xlu0 %920, %v887
      %v922 = vpop.permute.xlu0 %921
      %925 = vset.pattern.permute.xlu0 0
      %926 = vperm.xlu0 %925, %v888
      %v927 = vpop.permute.xlu0 %926
      %930 = vset.pattern.permute.xlu0 0
      %931 = vperm.xlu0 %930, %v889
      %v932 = vpop.permute.xlu0 %931
      %935 = vset.pattern.permute.xlu0 0
      %936 = vperm.xlu0 %935, %v890
      %v937 = vpop.permute.xlu0 %936
      %940 = vset.pattern.permute.xlu0 0
      %941 = vperm.xlu0 %940, %v891
      %v942 = vpop.permute.xlu0 %941
      %945 = vset.pattern.permute.xlu0 0
      %946 = vperm.xlu0 %945, %v892
      %v947 = vpop.permute.xlu0 %946
      %950 = vset.pattern.permute.xlu0 0
      %951 = vperm.xlu0 %950, %v893
      %v952 = vpop.permute.xlu0 %951
      %955 = vset.pattern.permute.xlu0 0
      %956 = vperm.xlu0 %955, %v894
      %v957 = vpop.permute.xlu0 %956
      %960 = vset.pattern.permute.xlu0 0
      %961 = vperm.xlu0 %960, %v895
      %v962 = vpop.permute.xlu0 %961
      %965 = vset.pattern.permute.xlu0 0
      %966 = vperm.xlu0 %965, %v896
      %v967 = vpop.permute.xlu0 %966
      %970 = vset.pattern.permute.xlu0 0
      %971 = vperm.xlu0 %970, %v897
      %v972 = vpop.permute.xlu0 %971
      %975 = vset.pattern.permute.xlu0 0
      %976 = vperm.xlu0 %975, %v898
      %v977 = vpop.permute.xlu0 %976
      %979 = vst [vmem:[#allocation5] sm:$0xff] %v902
      %980 = vst [vmem:[#allocation5 + $0x8] sm:$0xff] %v907
      %981 = vst [vmem:[#allocation5 + $0x10] sm:$0xff] %v912
      %982 = vst [vmem:[#allocation5 + $0x18] sm:$0xff] %v917
      %983 = vst [vmem:[#allocation5 + $0x20] sm:$0xff] %v922
      %984 = vst [vmem:[#allocation5 + $0x28] sm:$0xff] %v927
      %985 = vst [vmem:[#allocation5 + $0x30] sm:$0xff] %v932
      %986 = vst [vmem:[#allocation5 + $0x38] sm:$0xff] %v937
      %987 = vst [vmem:[#allocation5 + $0x40] sm:$0xff] %v942
      %988 = vst [vmem:[#allocation5 + $0x48] sm:$0xff] %v947
      %989 = vst [vmem:[#allocation5 + $0x50] sm:$0xff] %v952
      %990 = vst [vmem:[#allocation5 + $0x58] sm:$0xff] %v957
      %991 = vst [vmem:[#allocation5 + $0x60] sm:$0xff] %v962
      %992 = vst [vmem:[#allocation5 + $0x68] sm:$0xff] %v967
      %993 = vst [vmem:[#allocation5 + $0x70] sm:$0xff] %v972
      %994 = vst [vmem:[#allocation5 + $0x78] sm:$0xff] %v977
    $region25: #{tpu_custom_call.1} parent=1 // pred_fallthru
      _
    // Predicated region
    $region26: #{tpu_custom_call.1} parent=1 // pred_check
      _
    $region27: #{tpu_custom_call.1} parent=1 // pred_check_branch
      %996 = sbr.rel (0) target = $region29
    $region28: #{tpu_custom_call.1} parent=1 // pred_region
      %998 = vsyncadd [#allocation6], 0
      %s999 = sshll.u32 [#allocation5], 4
      %s1000 = int_to_ptr.vmem [resolvable:$true] %s999
      %s1001 = sshll.u32 %s4, 4
      %s1002 = int_to_ptr.hbm [resolvable:$true] %s1001
      %1007 = dma.vmem_to_hbm [thread:$0]  %s1000, 2048, %s1002, [#allocation6], 128, 128, 8
    $region29: #{tpu_custom_call.1} parent=1 // pred_fallthru
      _
    // Predicated region
    $region30: #{tpu_custom_call.1} parent=1 // pred_check
      _
    $region31: #{tpu_custom_call.1} parent=1 // pred_check_branch
      %1009 = sbr.rel (0) target = $region33
    $region32: #{tpu_custom_call.1} parent=1 // pred_region
      %1011 = dma.done [#allocation6], 2048
    $region33: #{tpu_custom_call.1} parent=1 // pred_fallthru
      _
    %1012 = vsyncpa [#allocation6], 1

</llo_original>
